<compile_context>
chip_gen: v5e
topology: v5e:2x2
jax: 0.10.0
libtpu: 0.0.40
codegen_flags: <defaults>
</compile_context>

<pallas_src>
from functools import partial

import jax
import jax.numpy as jnp
from jax.experimental import pallas as pl
from jax.experimental.pallas import tpu as pltpu


def _focal_loss_kernel(*refs, gamma, n_rows, steps_per_shard, needs_mask, weighted):
    if weighted:
        logits_ref, target_ref, wrow_ref, num_ref, den_ref = refs
    else:
        logits_ref, target_ref, num_ref = refs

    i = pl.program_id(1)                        # reduction ("arbitrary") axis

    @pl.when(i == 0)
    def _():
        num_ref[0] = jnp.zeros((1, 1), jnp.float32)
        if weighted:
            den_ref[0] = jnp.zeros((1, 1), jnp.float32)

    x = logits_ref[...].astype(jnp.float32)     # (TN, C)  upcast in-kernel
    t = target_ref[...]                         # (TN, 1)  int32
    tn, c = x.shape

    # log-softmax denominator needs the full class row (max-stabilized).
    m = jnp.max(x, axis=1, keepdims=True)       # (TN, 1)
    shifted = x - m                             # (TN, C)
    lse = jnp.log(jnp.sum(jnp.exp(shifted), axis=1, keepdims=True))  # (TN, 1)

    # Gather at the target class BEFORE the focal modulation: only the target
    # column of the modulated log_pt is ever used by nll_loss.
    class_ids = jax.lax.broadcasted_iota(jnp.int32, (tn, c), dimension=1)
    onehot = class_ids == t
    picked_shift = jnp.sum(jnp.where(onehot, shifted, 0.0),
                           axis=1, keepdims=True)                    # (TN, 1)

    log_pt_t = picked_shift - lse               # (TN, 1)
    pt_t = jnp.exp(log_pt_t)
    one_minus = 1.0 - pt_t
    if isinstance(gamma, int):
        mod = jax.lax.integer_pow(one_minus, gamma)   # plain multiplies
    else:
        mod = one_minus ** gamma
    focal_t = mod * log_pt_t                    # (TN, 1)

    if weighted:
        w_row = wrow_ref[...]                   # (TN, 1) f32, pre-gathered
        contrib_num = w_row * focal_t
        contrib_den = w_row
    else:
        contrib_num = focal_t
        contrib_den = None

    if needs_mask:
        # UNCLAMPED logical step: overflow tiles of the parallel split (whose
        # DMA was clamped in the index_map) and padded rows of the last real
        # tile both land at row ids >= n_rows and are zeroed AFTER the full
        # contribution is computed (NaN-safe).
        logical_step = pl.program_id(0) * steps_per_shard + i
        row_ids = logical_step * tn + jax.lax.broadcasted_iota(jnp.int32, (tn, 1), 0)
        valid = row_ids < n_rows
        contrib_num = jnp.where(valid, contrib_num, 0.0)
        if weighted:
            contrib_den = jnp.where(valid, contrib_den, 0.0)

    # Per-shard partial sums, resident in the (1,1,1) output block.
    num_ref[0] += jnp.sum(contrib_num, keepdims=True)
    if weighted:
        den_ref[0] += jnp.sum(contrib_den, keepdims=True)


def focal_loss(logits, target, weight=None, gamma=2, block_rows=None, num_shards=2):
    """Pallas FocalLoss forward (matches F.nll_loss(reduction='mean') semantics).

    Args:
      logits: (N, C) float array (any float dtype; upcast to f32 in-kernel).
      target: (N,) int array, values in [0, C).
      weight: optional (C,) per-class weight (None -> uniform).
      gamma:  focusing exponent (int -> integer_pow path).
      block_rows: optional row-tile override (rounded to the sublane multiple).
      num_shards: row-tile shards along the "parallel" grid axis (2 uses both
        TensorCores on v7x; harmless on 1-TC chips).

    Returns:
      scalar float32 loss.
    """
    n, c = logits.shape
    weighted = weight is not None
    target_i32 = target.astype(jnp.int32)
    target2d = target_i32.reshape(n, 1)

    # --- dtype-aware row-tile sizing -------------------------------------
    itemsize = jnp.dtype(logits.dtype).itemsize
    sublane = max(8, 32 // max(itemsize, 1))      # 8 f32 / 16 bf16 / 32 int8
    if block_rows is None:
        tn = (4 * 1024 * 1024) // max(c * 4, 1)   # ~4 MiB f32 working set
        tn = min(tn, 8192)                        # bound lane-padded columns
    else:
        tn = block_rows
    tn = max(sublane, (tn // sublane) * sublane)  # sublane-packing multiple
    if n <= tn:
        tn = n                                    # single full-extent block

    nsteps = pl.cdiv(n, tn)                       # total row tiles
    shards = max(1, min(num_shards, nsteps))      # "parallel" axis extent
    sps = pl.cdiv(nsteps, shards)                 # steps per shard
    last_block = nsteps - 1
    needs_mask = (shards * sps * tn) != n

    def row_block(cc, ii):
        # Clamp overflow tiles of the parallel split to a valid block; their
        # contributions are masked to zero in-kernel.
        return jnp.minimum(cc * sps + ii, last_block)

    in_specs = [
        pl.BlockSpec((tn, c), lambda cc, ii: (row_block(cc, ii), 0)),   # logits
        pl.BlockSpec((tn, 1), lambda cc, ii: (row_block(cc, ii), 0)),   # target
    ]
    inputs = [logits, target2d]                    # logits stay native dtype
    out_shapes = [jax.ShapeDtypeStruct((shards, 1, 1), jnp.float32)]    # num
    out_specs = [pl.BlockSpec((1, 1, 1), lambda cc, ii: (cc, 0, 0))]
    if weighted:
        # Hoisted O(N) per-row weight gather (replaces a (TN,C) select + XLU
        # reduction per tile in-kernel).
        w_row = jnp.asarray(weight, jnp.float32)[target_i32].reshape(n, 1)
        in_specs.append(pl.BlockSpec((tn, 1), lambda cc, ii: (row_block(cc, ii), 0)))
        inputs.append(w_row)
        out_shapes.append(jax.ShapeDtypeStruct((shards, 1, 1), jnp.float32))  # den
        out_specs.append(pl.BlockSpec((1, 1, 1), lambda cc, ii: (cc, 0, 0)))

    kernel = partial(_focal_loss_kernel, gamma=gamma, n_rows=n,
                     steps_per_shard=sps, needs_mask=needs_mask,
                     weighted=weighted)

    outs = pl.pallas_call(
        kernel,
        out_shape=tuple(out_shapes) if weighted else out_shapes[0],
        grid_spec=pltpu.PrefetchScalarGridSpec(
            num_scalar_prefetch=0,
            grid=(shards, sps),
            in_specs=in_specs,
            out_specs=out_specs if weighted else out_specs[0],
        ),
        compiler_params=pltpu.CompilerParams(
            dimension_semantics=("parallel", "arbitrary"),
            vmem_limit_bytes=32 * 1024 * 1024,     # safe on v5e/v6e/v7x
        ),
    )(*inputs)

    if weighted:
        num_parts, den_parts = outs
        return -jnp.sum(num_parts) / jnp.sum(den_parts)
    return -jnp.sum(outs) / jnp.float32(n)


def _focal_loss_ref(logits, target, weight=None, gamma=2):
    """Pure-JAX reference mirroring the PyTorch module."""
    log_pt = jax.nn.log_softmax(logits.astype(jnp.float32), axis=1)
    pt = jnp.exp(log_pt)
    log_pt = (1.0 - pt) ** gamma * log_pt
    n, c = logits.shape
    if weight is None:
        weight = jnp.ones((c,), jnp.float32)
    picked = jnp.take_along_axis(log_pt, target[:, None], axis=1)[:, 0]
    w_row = jnp.asarray(weight, jnp.float32)[target]
    return -jnp.sum(w_row * picked) / jnp.sum(w_row)


if __name__ == "__main__":
    key = jax.random.PRNGKey(0)
    k1, k2, k3, k4 = jax.random.split(key, 4)

    # --- small single-block case (matches module spec: (N, C) logits) ---
    N, C = 8, 32
    logits = jax.random.normal(k1, (N, C), jnp.float32)
    target = jax.random.randint(k2, (N,), 0, C, jnp.int32)
    weight = 0.5 + 0.05 * jnp.arange(C, dtype=jnp.float32)

    loss = focal_loss(logits, target, weight=None, gamma=2)
    jax.block_until_ready(loss)
    ref = _focal_loss_ref(logits, target, weight=None, gamma=2)
    assert jnp.allclose(loss, ref, rtol=1e-5, atol=1e-5), (loss, ref)

    loss_w = focal_loss(logits, target, weight=weight, gamma=2)
    jax.block_until_ready(loss_w)
    ref_w = _focal_loss_ref(logits, target, weight=weight, gamma=2)
    assert jnp.allclose(loss_w, ref_w, rtol=1e-5, atol=1e-5), (loss_w, ref_w)

    # --- tiled case: 2-D (parallel, arbitrary) grid with 2 shards, an odd
    # tile count (clamped overflow tile), non-divisible N (padded-row mask),
    # and native bf16 input with bf16-sublane (16-row) tiles ---
    N2, C2 = 72, 32
    logits2 = jax.random.normal(k3, (N2, C2), jnp.bfloat16)
    target2 = jax.random.randint(k4, (N2,), 0, C2, jnp.int32)
    weight2 = 0.5 + 0.01 * jnp.arange(C2, dtype=jnp.float32)

    loss2 = focal_loss(logits2, target2, weight=weight2, gamma=2, block_rows=16)
    jax.block_until_ready(loss2)
    ref2 = _focal_loss_ref(logits2, target2, weight=weight2, gamma=2)
    assert jnp.allclose(loss2, ref2, rtol=1e-4, atol=1e-5), (loss2, ref2)

    loss3 = focal_loss(logits2, target2, weight=None, gamma=2, block_rows=16)
    jax.block_until_ready(loss3)
    ref3 = _focal_loss_ref(logits2, target2, weight=None, gamma=2)
    assert jnp.allclose(loss3, ref3, rtol=1e-4, atol=1e-5), (loss3, ref3)

    print("KERNEL_OK")
</pallas_src>

<mosaic_0001>
module attributes {stable_mosaic.version = 11 : i64} {
  func.func @_focal_loss_kernel(%arg0: i32, %arg1: i32, %arg2: memref<8x32xf32, #tpu.memory_space<vmem>>, %arg3: memref<8x1xi32, #tpu.memory_space<vmem>>, %arg4: memref<1x1x1xf32, #tpu.memory_space<vmem>>) attributes {dimension_semantics = [#tpu.dimension_semantics<parallel>, #tpu.dimension_semantics<arbitrary>], iteration_bounds = array<i64: 1, 1>, scalar_prefetch = 0 : i64, scratch_operands = 0 : i64, tpu.core_type = #tpu.core_type<tc>, window_params = [{transform_indices = @transform_0, window_bounds = array<i64: 8, 32>}, {transform_indices = @transform_1, window_bounds = array<i64: 8, 1>}, {transform_indices = @transform_2, window_bounds = array<i64: 1, 1, 1>}]} {
    %c0_i32 = arith.constant 0 : i32
    %0 = arith.cmpi eq, %arg1, %c0_i32 : i32
    %1 = arith.extui %0 : i1 to i32
    %c0_i32_0 = arith.constant 0 : i32
    %2 = arith.cmpi ne, %1, %c0_i32_0 : i32
    scf.if %2 {
      %cst_15 = arith.constant 0.000000e+00 : f32
      %37 = vector.broadcast %cst_15 : f32 to vector<1x1xf32>
      %c0_16 = arith.constant 0 : index
      %c0_17 = arith.constant 0 : index
      %c0_18 = arith.constant 0 : index
      %38 = vector.load %arg4[%c0_16, %c0_17, %c0_18] : memref<1x1x1xf32, #tpu.memory_space<vmem>>, vector<1x1x1xf32>
      %39 = vector.shape_cast %38 : vector<1x1x1xf32> to vector<1x1xf32>
      %40 = vector.shape_cast %37 : vector<1x1xf32> to vector<1x1x1xf32>
      tpu.vector_store %arg4[%c0_16, %c0_17, %c0_18], %40 {strides = array<i32>} : memref<1x1x1xf32, #tpu.memory_space<vmem>>, vector<1x1x1xf32>,
    } else {
    }
    %c0 = arith.constant 0 : index
    %c0_1 = arith.constant 0 : index
    %3 = vector.load %arg2[%c0, %c0_1] : memref<8x32xf32, #tpu.memory_space<vmem>>, vector<8x32xf32>
    %c0_2 = arith.constant 0 : index
    %c0_3 = arith.constant 0 : index
    %4 = vector.load %arg3[%c0_2, %c0_3] : memref<8x1xi32, #tpu.memory_space<vmem>>, vector<8x1xi32>
    %cst = arith.constant dense<0xFF800000> : vector<8xf32>
    %5 = vector.multi_reduction <maximumf>, %3, %cst [1] : vector<8x32xf32> to vector<8xf32>
    %6 = vector.shape_cast %5 : vector<8xf32> to vector<8x1xf32>
    %7 = vector.broadcast %6 : vector<8x1xf32> to vector<8x32xf32>
    %8 = arith.subf %3, %7 : vector<8x32xf32>
    %9 = math.exp %8 : vector<8x32xf32>
    %cst_4 = arith.constant dense<0.000000e+00> : vector<8xf32>
    %10 = vector.multi_reduction <add>, %9, %cst_4 [1] : vector<8x32xf32> to vector<8xf32>
    %11 = vector.shape_cast %10 : vector<8xf32> to vector<8x1xf32>
    %12 = math.log %11 : vector<8x1xf32>
    %13 = tpu.iota {dimensions = array<i32: 1>} : vector<8x32xi32>
    %14 = vector.broadcast %4 : vector<8x1xi32> to vector<8x32xi32>
    %15 = arith.cmpi eq, %13, %14 : vector<8x32xi32>
    %cst_5 = arith.constant 0.000000e+00 : f32
    %16 = vector.broadcast %cst_5 : f32 to vector<8x32xf32>
    %17 = arith.select %15, %8, %16 : vector<8x32xi1>, vector<8x32xf32>
    %cst_6 = arith.constant dense<0.000000e+00> : vector<8xf32>
    %18 = vector.multi_reduction <add>, %17, %cst_6 [1] : vector<8x32xf32> to vector<8xf32>
    %19 = vector.shape_cast %18 : vector<8xf32> to vector<8x1xf32>
    %20 = arith.subf %19, %12 : vector<8x1xf32>
    %21 = math.exp %20 : vector<8x1xf32>
    %cst_7 = arith.constant 1.000000e+00 : f32
    %22 = vector.broadcast %cst_7 : f32 to vector<8x1xf32>
    %23 = arith.subf %22, %21 : vector<8x1xf32>
    %24 = arith.mulf %23, %23 : vector<8x1xf32>
    %25 = arith.mulf %24, %20 : vector<8x1xf32>
    %c0_8 = arith.constant 0 : index
    %c0_9 = arith.constant 0 : index
    %c0_10 = arith.constant 0 : index
    %26 = vector.load %arg4[%c0_8, %c0_9, %c0_10] : memref<1x1x1xf32, #tpu.memory_space<vmem>>, vector<1x1x1xf32>
    %27 = vector.shape_cast %26 : vector<1x1x1xf32> to vector<1x1xf32>
    %28 = vector.shape_cast %25 : vector<8x1xf32> to vector<1x8x1xf32>
    %cst_11 = arith.constant dense<0.000000e+00> : vector<1xf32>
    %29 = vector.multi_reduction <add>, %28, %cst_11 [1, 2] : vector<1x8x1xf32> to vector<1xf32>
    %30 = vector.shape_cast %29 : vector<1xf32> to vector<1x1x1xf32>
    %31 = vector.extract %30[0, 0, 0] : f32 from vector<1x1x1xf32>
    %32 = vector.broadcast %31 : f32 to vector<1x1xf32>
    %33 = arith.addf %27, %32 : vector<1x1xf32>
    %c0_12 = arith.constant 0 : index
    %c0_13 = arith.constant 0 : index
    %c0_14 = arith.constant 0 : index
    %34 = vector.load %arg4[%c0_12, %c0_13, %c0_14] : memref<1x1x1xf32, #tpu.memory_space<vmem>>, vector<1x1x1xf32>
    %35 = vector.shape_cast %34 : vector<1x1x1xf32> to vector<1x1xf32>
    %36 = vector.shape_cast %33 : vector<1x1xf32> to vector<1x1x1xf32>
    tpu.vector_store %arg4[%c0_12, %c0_13, %c0_14], %36 {strides = array<i32>} : memref<1x1x1xf32, #tpu.memory_space<vmem>>, vector<1x1x1xf32>,
    return
  }
  func.func @transform_0(%arg0: i32, %arg1: i32) -> (i32, i32) {
    %c1_i32 = arith.constant 1 : i32
    %0 = arith.muli %arg0, %c1_i32 : i32
    %1 = arith.addi %0, %arg1 : i32
    %c0_i32 = arith.constant 0 : i32
    %2 = arith.minsi %1, %c0_i32 : i32
    %c0_i32_0 = arith.constant 0 : i32
    %c0_i32_1 = arith.constant 0 : i32
    return %2, %c0_i32_0 : i32, i32
  }
  func.func @transform_1(%arg0: i32, %arg1: i32) -> (i32, i32) {
    %c1_i32 = arith.constant 1 : i32
    %0 = arith.muli %arg0, %c1_i32 : i32
    %1 = arith.addi %0, %arg1 : i32
    %c0_i32 = arith.constant 0 : i32
    %2 = arith.minsi %1, %c0_i32 : i32
    %c0_i32_0 = arith.constant 0 : i32
    %c0_i32_1 = arith.constant 0 : i32
    return %2, %c0_i32_0 : i32, i32
  }
  func.func @transform_2(%arg0: i32, %arg1: i32) -> (i32, i32, i32) {
    %c0_i32 = arith.constant 0 : i32
    %c0_i32_0 = arith.constant 0 : i32
    %c0_i32_1 = arith.constant 0 : i32
    return %arg0, %c0_i32, %c0_i32_0 : i32, i32, i32
  }
}

</mosaic_0001>

<llo_original>
// kernel: tpu_custom_call.1
$region0: #{tpu_custom_call.1}
  #allocation0 [shape = 'u32[]', space=smem, size = 0x4, offset = 0x4, fixed_abs, tag = 'smem constant byte address 0x4 - core index']
  #allocation1 [shape = 'u32[72,128]{1,0:T(1,128)}', space=vmem, size = 0x9000, scoped, tag = 'internal scratch']
  %s0 = inlined_call_operand.vmem [shape: f32[8,32], index: 0, kind: input, shape index: {}]
  %s1 = inlined_call_operand.vmem [shape: s32[8,1], index: 1, kind: input, shape index: {}]
  %s2 = inlined_call_operand.hbm [shape: f32[1,1,1], index: 2, kind: output, shape index: {}]
  %s3 = sld [smem:[#allocation0]]
  $region22: #{tpu_custom_call.1} parent=0
    _
  %s5 = ssub.s32 1, %s3
  %s6 = scalar_select 0, %s5, %s3
  $region1: #{tpu_custom_call.1} parent=0
    #allocation2 [shape = 'u8[512]{0}', space=vmem, size = 0x400, scoped, tag = 'output window, operand 0, single buffered']
    #allocation3 [shape = 's32[1]{0}', space=sflag, size = 0x4, scoped, tag = 'scoped memory for tpu_custom_call.1']
    %7 = vsyncpa [#allocation3], 0
    // Predicated region
    $region2: #{tpu_custom_call.1} parent=1 // pred_check
      _
    $region3: #{tpu_custom_call.1} parent=1 // pred_check_branch
      %9 = sbr.rel (0) target = $region5
    $region4: #{tpu_custom_call.1} parent=1 // pred_region
      %s10 = sadd.s32 0, 0
      %p11 = scmp.lt.s32.totalorder %s10, 0
      %s12 = scalar_select %p11, %s10, 0
      %p13 = scmp.lt.s32.totalorder %s12, 0
      %s14 = scalar_select %p13, %s12, 0
      %s15 = smul.addr %s14, 8
      %s16 = scalar_lea.vmem %s0, %s15
      %s17 = sadd.s32 0, 0
      %p18 = scmp.lt.s32.totalorder %s17, 0
      %s19 = scalar_select %p18, %s17, 0
    $region5: #{tpu_custom_call.1} parent=1 // pred_fallthru
      _
    // Predicated region
    $region6: #{tpu_custom_call.1} parent=1 // pred_check
      _
    $region7: #{tpu_custom_call.1} parent=1 // pred_check_branch
      %21 = sbr.rel (0) target = $region9
    $region8: #{tpu_custom_call.1} parent=1 // pred_region
      %s22 = sadd.s32 0, 0
      %p23 = scmp.lt.s32.totalorder %s22, 0
      %s24 = scalar_select %p23, %s22, 0
      %p25 = scmp.lt.s32.totalorder %s24, 0
      %s26 = scalar_select %p25, %s24, 0
      %s27 = smul.addr %s26, 8
      %s28 = scalar_lea.vmem %s1, %s27
      %s29 = sadd.s32 0, 0
      %p30 = scmp.lt.s32.totalorder %s29, 0
      %s31 = scalar_select %p30, %s29, 0
    $region9: #{tpu_custom_call.1} parent=1 // pred_fallthru
      _
    %s32 = sadd.s32 0, 0
    %p33 = scmp.lt.s32.totalorder %s32, 0
    %s34 = scalar_select %p33, %s32, 0
    %p35 = scmp.lt.s32.totalorder %s34, 0
    %s36 = scalar_select %p35, %s34, 0
    %s37 = smul.addr %s36, 8
    %s38 = scalar_lea.vmem %s0, %s37
    %s39 = sadd.s32 0, 0
    %p40 = scmp.lt.s32.totalorder %s39, 0
    %s41 = scalar_select %p40, %s39, 0
    %p42 = scmp.lt.s32.totalorder %s41, 0
    %s43 = scalar_select %p42, %s41, 0
    %s44 = smul.addr %s43, 8
    %s45 = scalar_lea.vmem %s1, %s44
    %s46 = sadd.s32 0, 0
    %p47 = scmp.lt.s32.totalorder %s46, 0
    %s48 = scalar_select %p47, %s46, 0
    %p49 = scmp.lt.s32.totalorder %s48, 0
    %s50 = scalar_select %p49, %s48, 0
    %s51 = smul.addr %s50, 8
    %s52 = scalar_lea.vmem %s0, %s51
    %s53 = sadd.s32 0, 0
    %p54 = scmp.lt.s32.totalorder %s53, 0
    %s55 = scalar_select %p54, %s53, 0
    %s56 = sadd.s32 0, 0
    %p57 = scmp.lt.s32.totalorder %s56, 0
    %s58 = scalar_select %p57, %s56, 0
    %p59 = scmp.lt.s32.totalorder %s58, 0
    %s60 = scalar_select %p59, %s58, 0
    %s61 = smul.addr %s60, 8
    %s62 = scalar_lea.vmem %s1, %s61
    %s63 = sadd.s32 0, 0
    %p64 = scmp.lt.s32.totalorder %s63, 0
    %s65 = scalar_select %p64, %s63, 0
    %p66 = scmp.eq.s32.totalorder 0, 0
    // Predicated region
    $region10: #{tpu_custom_call.1} parent=1 // pred_check
      %p67 = pneg %p66
    $region11: #{tpu_custom_call.1} parent=1 // pred_check_branch
      %69 = sbr.rel (%p67) target = $region13
    $region12: #{tpu_custom_call.1} parent=1 // pred_region
      %vm70 = vcmask 0
      %71 = vst.msk [vmem:[#allocation2] sm:$0x1] %vm70, 0.0
    $region13: #{tpu_custom_call.1} parent=1 // pred_fallthru
      _
    %v72 = vld [vmem:[%s52] sm:$0xff]
    %v73 = vld [vmem:[%s62] sm:$0xff]
    %vm74 = vcmask 261120
    %v75 = vsel %vm74, %v72, -inf
    %76 = vmax.xlane.f32.xlu0 %v75
    %v77 = vpop.xlane.xlu0 %76
    %v78 = vsub.f32 %v72, %v77
    %v79 = vmul.f32 %v78, 1.442695
    %v80 = vpow.pop %v79
    %v81 = vsel %vm74, %v80, 0.0
    %82 = vadd.xlane.f32.xlu0 %v81
    %v83 = vpop.xlane.xlu0 %82
    %v84 = vlog2.pop %v83
    %v85 = vmul.f32 %v84, 0.6931472
    %v86 = vlaneseq
    %v87 = vand.u32 %v86, 127
    %88 = vset.pattern.permute.xlu0 0
    %89 = vperm.xlu0 %88, %v73
    %v90 = vpop.permute.xlu0 %89
    %vm91 = vcmp.eq.s32.totalorder %v87, %v90
    %v92 = vsel %vm91, %v78, 0.0
    %v93 = vsel %vm74, %v92, 0.0
    %94 = vadd.xlane.f32.xlu0 %v93
    %v95 = vpop.xlane.xlu0 %94
    %v96 = vsub.f32 %v95, %v85
    %v97 = vmul.f32 %v96, 1.442695
    %v98 = vpow.pop %v97
    %v99 = vsub.f32 1.0, %v98
    %v100 = vmul.f32 %v99, %v99
    %v101 = vmul.f32 %v100, %v96
    %v102 = vld [vmem:[#allocation2] sm:$0x1]
    %vm103 = vcmask 7168
    %v104 = vsel %vm103, %v101, 0.0
    %105 = vadd.xlane.f32.xlu0 %v104
    %v106 = vpop.xlane.xlu0 %105
    %v107 = vrot.slane %v106, 4
    %v108 = vadd.f32 %v106, %v107
    %v109 = vrot.slane %v108, 2
    %v110 = vadd.f32 %v108, %v109
    %v111 = vrot.slane %v110, 1
    %v112 = vadd.f32 %v110, %v111
    %s113 = vtos %v112
    %v114 = vstv %s113
    %v115 = vadd.f32 %v102, %v114
    %vm116 = vcmask 0
    %117 = vst.msk [vmem:[#allocation2] sm:$0x1] %vm116, %v115
    // Predicated region
    $region14: #{tpu_custom_call.1} parent=1 // pred_check
      _
    $region15: #{tpu_custom_call.1} parent=1 // pred_check_branch
      %119 = sbr.rel (0) target = $region17
    $region16: #{tpu_custom_call.1} parent=1 // pred_region
      %121 = vsyncadd [#allocation3], 0
      %s123 = sshll.u32 [#allocation2], 4
      %s124 = int_to_ptr.vmem [resolvable:$true] %s123
      %s125 = sshll.u32 %s2, 4
      %s126 = int_to_ptr.hbm [resolvable:$true] %s125
      %128 = dma.vmem_to_hbm [thread:$0]  %s124, 16, %s126, [#allocation3]
    $region17: #{tpu_custom_call.1} parent=1 // pred_fallthru
      _
    // Predicated region
    $region18: #{tpu_custom_call.1} parent=1 // pred_check
      _
    $region19: #{tpu_custom_call.1} parent=1 // pred_check_branch
      %130 = sbr.rel (0) target = $region21
    $region20: #{tpu_custom_call.1} parent=1 // pred_region
      %132 = dma.done [#allocation3], 16
    $region21: #{tpu_custom_call.1} parent=1 // pred_fallthru
      _
    %133 = vsyncpa [#allocation3], 1

</llo_original>
